<compile_context>
chip_gen: v6e
topology: v6e:2x2x1
jax: 0.10.0
libtpu: 0.0.40
codegen_flags: <defaults>
</compile_context>

<pallas_src>
import math

import jax
import jax.numpy as jnp
from jax.experimental import pallas as pl
from jax.experimental.pallas import tpu as pltpu

_LANE = 128
_DEFAULT_BLOCK_BYTES = 1 << 20   # ~1 MiB per array per block (~85% HBM roofline)


def _sublane_multiple(dtype):
    # 8 for f32, 16 for bf16, 32 for int8/fp8 (packed sublane groups).
    return max(8, 32 // jnp.dtype(dtype).itemsize)


def _pick_tile_rows(dtype, m_rows, block_bytes):
    sub = _sublane_multiple(dtype)
    max_rows = block_bytes // (_LANE * jnp.dtype(dtype).itemsize)
    max_rows = max(sub, (max_rows // sub) * sub)
    if m_rows <= max_rows:
        return m_rows          # single block along rows: block dim == array dim
    return max_rows            # ragged last block is masked by Pallas


def _lane_dense(x):
    """(B, ...) -> (B, m_rows, 128); pad lanes only when total % 128 != 0."""
    B = x.shape[0]
    total = math.prod(x.shape[1:])
    m_rows = pl.cdiv(total, _LANE)
    padded = m_rows * _LANE
    xf = x.reshape(B, total)
    if padded != total:
        xf = jnp.pad(xf, ((0, 0), (0, padded - total)))
    return xf.reshape(B, m_rows, _LANE), total, padded, m_rows


def _drop_path_scale(batch, drop_prob, key):
    """Per-sample scale: 1/keep_prob for kept samples, 0 for dropped."""
    keep_prob = 1.0 - drop_prob
    u = jax.random.uniform(key, (batch,), dtype=jnp.float32)
    mask = jnp.floor(keep_prob + u)                       # 0.0 or 1.0
    inv = (1.0 / keep_prob) if keep_prob > 0.0 else 0.0   # guard keep_prob == 0
    return jnp.where(mask == 1.0, jnp.float32(inv), jnp.float32(0.0))


# ---------------------------------------------------------------------------
# Kernels
# ---------------------------------------------------------------------------

def _scale_kernel(scale_ref, x_ref, o_ref):
    """o = x * scale[b]   (standalone DropPath)."""
    b = pl.program_id(0)
    o_ref[...] = x_ref[...] * scale_ref[b].astype(o_ref.dtype)


def _residual_scale_kernel(scale_ref, shortcut_ref, x_ref, o_ref):
    """o = shortcut + x * scale[b]   (fused ConvNeXt residual + DropPath)."""
    b = pl.program_id(0)
    o_ref[...] = shortcut_ref[...] + x_ref[...] * scale_ref[b].astype(o_ref.dtype)


def _launch(kernel, scale, arrays, B, m_rows, tile_rows, dtype):
    grid = (B, pl.cdiv(m_rows, tile_rows))
    spec = pl.BlockSpec((1, tile_rows, _LANE), lambda b, m, scale_ref: (b, m, 0))
    return pl.pallas_call(
        kernel,
        out_shape=jax.ShapeDtypeStruct((B, m_rows, _LANE), dtype),
        grid_spec=pltpu.PrefetchScalarGridSpec(
            num_scalar_prefetch=1,        # per-sample scale -> SMEM
            grid=grid,
            in_specs=[spec] * len(arrays),
            out_specs=spec,
        ),
        compiler_params=pltpu.CompilerParams(
            dimension_semantics=("parallel", "parallel")),
    )(scale, *arrays)


# ---------------------------------------------------------------------------
# Public functional API
# ---------------------------------------------------------------------------

def drop_path(x, *, drop_prob, training, key, block_bytes=_DEFAULT_BLOCK_BYTES):
    """Standalone DropPath matching the PyTorch module's forward()."""
    if drop_prob == 0.0 or not training:
        return x
    B = x.shape[0]
    scale = _drop_path_scale(B, drop_prob, key)
    x3, total, padded, m_rows = _lane_dense(x)
    tile_rows = _pick_tile_rows(x.dtype, m_rows, block_bytes)
    out = _launch(_scale_kernel, scale, (x3,), B, m_rows, tile_rows, x.dtype)
    out = out.reshape(B, padded)
    if padded != total:
        out = out[:, :total]
    return out.reshape(x.shape)


def drop_path_add(shortcut, x, *, drop_prob, training, key,
                  block_bytes=_DEFAULT_BLOCK_BYTES):
    """Fused ConvNeXtBlock residual: shortcut + drop_path(x) in one HBM pass."""
    if drop_prob == 0.0 or not training:
        return shortcut + x
    assert shortcut.shape == x.shape and shortcut.dtype == x.dtype
    B = x.shape[0]
    scale = _drop_path_scale(B, drop_prob, key)
    s3, total, padded, m_rows = _lane_dense(shortcut)
    x3, _, _, _ = _lane_dense(x)
    tile_rows = _pick_tile_rows(x.dtype, m_rows, block_bytes)
    out = _launch(_residual_scale_kernel, scale, (s3, x3), B, m_rows, tile_rows,
                  x.dtype)
    out = out.reshape(B, padded)
    if padded != total:
        out = out[:, :total]
    return out.reshape(x.shape)


# ---------------------------------------------------------------------------
# Pure-JAX reference (same RNG construction; torch stream not reproducible)
# ---------------------------------------------------------------------------

def _reference_drop_path(x, drop_prob, key):
    scale = _drop_path_scale(x.shape[0], drop_prob, key).astype(x.dtype)
    return x * scale.reshape((x.shape[0],) + (1,) * (x.ndim - 1))


if __name__ == "__main__":
    root = jax.random.PRNGKey(0)
    kx, ks, km = jax.random.split(root, 3)
    drop_prob = 0.2

    # --- aligned shape (C*H*W multiple of 128), f32, standalone kernel ---
    B, C, H, W = 2, 4, 16, 16
    x = jax.random.normal(kx, (B, C, H, W), dtype=jnp.float32)
    shortcut = jax.random.normal(ks, (B, C, H, W), dtype=jnp.float32)

    y = jax.block_until_ready(
        drop_path(x, drop_prob=drop_prob, training=True, key=km))
    ref = _reference_drop_path(x, drop_prob, km)
    assert jnp.allclose(y, ref, atol=1e-6), "standalone drop_path mismatch (f32)"

    # --- fused residual + DropPath (the ConvNeXtBlock epilogue) ---
    yf = jax.block_until_ready(
        drop_path_add(shortcut, x, drop_prob=drop_prob, training=True, key=km))
    assert jnp.allclose(yf, shortcut + ref, atol=1e-6), "fused residual mismatch"

    # --- bf16: native-dtype math inside the kernel ---
    x_bf, s_bf = x.astype(jnp.bfloat16), shortcut.astype(jnp.bfloat16)
    y_bf = jax.block_until_ready(
        drop_path_add(s_bf, x_bf, drop_prob=drop_prob, training=True, key=km))
    ref_bf = s_bf + _reference_drop_path(x_bf, drop_prob, km)
    assert jnp.allclose(y_bf.astype(jnp.float32), ref_bf.astype(jnp.float32),
                        atol=1e-2, rtol=1e-2), "fused residual mismatch (bf16)"

    # --- ragged last block: m_rows=10 with tile_rows=8, no jnp.pad involved ---
    x_r = jax.random.normal(kx, (2, 4, 20, 16), dtype=jnp.float32)
    y_r = jax.block_until_ready(
        drop_path(x_r, drop_prob=drop_prob, training=True, key=km,
                  block_bytes=8 * _LANE * 4))
    assert jnp.allclose(y_r, _reference_drop_path(x_r, drop_prob, km),
                        atol=1e-6), "ragged-last-block mismatch"

    # --- non-128-multiple shape exercises the (rare) lane-pad fallback ---
    x_p = jax.random.normal(kx, (2, 3, 7, 7), dtype=jnp.float32)
    y_p = jax.block_until_ready(
        drop_path(x_p, drop_prob=drop_prob, training=True, key=km))
    assert jnp.allclose(y_p, _reference_drop_path(x_p, drop_prob, km),
                        atol=1e-6), "lane-padded-path mismatch"

    # --- eval / drop_prob==0 -> identity ---
    assert jnp.allclose(jax.block_until_ready(
        drop_path(x, drop_prob=drop_prob, training=False, key=km)), x)
    assert jnp.allclose(jax.block_until_ready(
        drop_path(x, drop_prob=0.0, training=True, key=km)), x)

    print("KERNEL_OK")
</pallas_src>

<mosaic_0001>
module attributes {stable_mosaic.version = 11 : i64} {
  func.func @_scale_kernel(%arg0: i32, %arg1: i32, %arg2: memref<2xf32, #tpu.memory_space<smem>>, %arg3: memref<1x8x128xf32, #tpu.memory_space<vmem>>, %arg4: memref<1x8x128xf32, #tpu.memory_space<vmem>>) attributes {dimension_semantics = [#tpu.dimension_semantics<parallel>, #tpu.dimension_semantics<parallel>], iteration_bounds = array<i64: 2, 1>, scalar_prefetch = 1 : i64, scratch_operands = 0 : i64, tpu.core_type = #tpu.core_type<tc>, window_params = [{transform_indices = @transform_0, window_bounds = array<i64: 1, 8, 128>}, {transform_indices = @transform_1, window_bounds = array<i64: 1, 8, 128>}]} {
    %c0 = arith.constant 0 : index
    %c0_0 = arith.constant 0 : index
    %c0_1 = arith.constant 0 : index
    %0 = vector.load %arg3[%c0, %c0_0, %c0_1] : memref<1x8x128xf32, #tpu.memory_space<vmem>>, vector<1x8x128xf32>
    %1 = arith.index_cast %arg0 : i32 to index
    %2 = memref.load %arg2[%1] : memref<2xf32, #tpu.memory_space<smem>>
    %3 = vector.broadcast %2 : f32 to vector<1x8x128xf32>
    %4 = arith.mulf %0, %3 : vector<1x8x128xf32>
    %c0_2 = arith.constant 0 : index
    %c0_3 = arith.constant 0 : index
    %c0_4 = arith.constant 0 : index
    %5 = vector.load %arg4[%c0_2, %c0_3, %c0_4] : memref<1x8x128xf32, #tpu.memory_space<vmem>>, vector<1x8x128xf32>
    tpu.vector_store %arg4[%c0_2, %c0_3, %c0_4], %4 {strides = array<i32>} : memref<1x8x128xf32, #tpu.memory_space<vmem>>, vector<1x8x128xf32>,
    return
  }
  func.func @transform_0(%arg0: i32, %arg1: i32, %arg2: memref<2xf32, #tpu.memory_space<smem>>) -> (i32, i32, i32) {
    %c0_i32 = arith.constant 0 : i32
    %c0_i32_0 = arith.constant 0 : i32
    return %arg0, %arg1, %c0_i32 : i32, i32, i32
  }
  func.func @transform_1(%arg0: i32, %arg1: i32, %arg2: memref<2xf32, #tpu.memory_space<smem>>) -> (i32, i32, i32) {
    %c0_i32 = arith.constant 0 : i32
    %c0_i32_0 = arith.constant 0 : i32
    return %arg0, %arg1, %c0_i32 : i32, i32, i32
  }
}

</mosaic_0001>

<llo_original>
// kernel: tpu_custom_call.1
$region0: #{tpu_custom_call.1}
  #allocation0 [shape = 'u32[]', space=smem, size = 0x4, offset = 0x4, fixed_abs, tag = 'smem constant byte address 0x4 - core index']
  #allocation1 [shape = 'u32[144,128]{1,0:T(1,128)}', space=vmem, size = 0x12000, scoped, tag = 'internal scratch']
  #allocation2 [shape = 's32[1]{0}', space=sflag, size = 0x4, scoped, tag = 'scoped memory for tpu_custom_call.1']
  #allocation3 [shape = 'u8[512]{0}', space=smem, size = 0x200, scoped, tag = 'prefetched SMEM operand 0']
  %s0 = inlined_call_operand.hbm [shape: f32[2], index: 0, kind: input, shape index: {}]
  %s1 = inlined_call_operand.hbm [shape: f32[2,8,128], index: 1, kind: input, shape index: {}]
  %s2 = inlined_call_operand.hbm [shape: f32[2,8,128], index: 2, kind: output, shape index: {}]
  %s3 = sld [smem:[#allocation0]]
  $region41: #{tpu_custom_call.1} parent=0
    _
  %s5 = ssub.s32 1, %s3
  %s6 = scalar_select 0, %s5, %s3
  %8 = dma.hbm_to_smem %s0, 16, [#allocation3], [#allocation2]
  %9 = dma.done [#allocation2], 16
  %10 = sfence
  $region1: #{tpu_custom_call.1} parent=0
    #allocation4 [shape = 'u8[8192]{0}', space=vmem, size = 0x2000, scoped, tag = 'input window, operand 1']
    #allocation5 [shape = 's32[2]{0}', space=sflag, size = 0x8, scoped, tag = 'scoped memory for tpu_custom_call.1']
    #allocation6 [shape = 's32[2]{0}', space=sflag, size = 0x8, scoped, tag = 'scoped memory for tpu_custom_call.1']
    #allocation7 [shape = 'u8[8192]{0}', space=vmem, size = 0x2000, scoped, tag = 'output window, operand 0']
    %11 = vsyncpa [#allocation5], 0
    %s12 = scalar_lea.sflag [#allocation5], 1
    %13 = vsyncpa %s12, 0
    %14 = vsyncpa [#allocation6], 0
    %s15 = scalar_lea.sflag [#allocation6], 1
    %16 = vsyncpa %s15, 0
    loop: start=0, step=1, limit=4
    $region2: #{tpu_custom_call.1} parent=1 // loop_pre_header
      _
    $region3: #{tpu_custom_call.1} parent=1 // loop_header
      %s18 = sphi 0, %s22
      %p19 = scmp.ge.s32.totalorder %s18, 4
      %s25 = sphi 0, %s37
      %s26 = sphi 0, %s33
      %s27 = sphi 0, %s25
      %s28 = sphi 0, %s26
      %s29 = sphi 0, %s27
      %s30 = sphi 0, %s28
      %s42 = sphi 0, %s44
      %s45 = sphi 0, %s42
      %s46 = sphi 0, %s45
      %s62 = sphi 0, %s46
      %s70 = sphi 0, %s72
      %s73 = sphi 0, %s70
      %s74 = sphi 0, %s73
      %s90 = sphi 0, %s74
    $region4: #{tpu_custom_call.1} parent=1 // loop_header_branch
      %21 = sbr.rel (%p19) target = $region8
    $region5: #{tpu_custom_call.1} parent=1 // loop_body
      %s23 = ssub.s32 %s18, 1
      %s24 = ssub.s32 %s18, 2
      %s31 = sadd.s32 1, %s26
      %p32 = scmp.ge.s32.totalorder %s31, 1
      %s33 = scalar_select %p32, 0, %s31
      %s34 = sadd.s32 1, %s25
      %s35 = scalar_select %p32, %s34, %s25
      %p36 = scmp.ge.s32.totalorder %s35, 2
      %s37 = scalar_select %p36, 0, %s35
      %s38 = ssub.s32 %s25, %s37
      %s39 = ssub.s32 %s26, %s33
      %s40 = sor.u32 %s38, %s39
      %p41 = scmp.eq.s32.totalorder %s40, 0
      %s43 = sadd.s32 %s42, 1
      %s44 = scalar_select %p41, %s42, %s43
      %p47 = pneg %p41
      %p48 = scmp.eq.s32.totalorder %s18, 1
      %p49 = por %p47, %p48
      %p50 = scmp.ne.s32.totalorder %s42, %s45
      %p51 = scmp.eq.s32.totalorder %s18, 0
      %p52 = por %p50, %p51
      %p53 = scmp.ne.s32.totalorder %s42, %s45
      %p54 = scmp.eq.s32.totalorder %s23, 1
      %p55 = por %p53, %p54
      %p56 = scmp.ne.s32.totalorder %s45, %s46
      %p57 = scmp.eq.s32.totalorder %s23, 0
      %p58 = por %p56, %p57
      %p59 = scmp.ne.s32.totalorder %s45, %s46
      %p60 = scmp.eq.s32.totalorder %s24, 1
      %p61 = por %p59, %p60
      %p63 = scmp.ne.s32.totalorder %s46, %s62
      %p64 = scmp.eq.s32.totalorder %s24, 0
      %p65 = por %p63, %p64
      %s66 = ssub.s32 %s25, %s37
      %s67 = ssub.s32 %s26, %s33
      %s68 = sor.u32 %s66, %s67
      %p69 = scmp.eq.s32.totalorder %s68, 0
      %s71 = sadd.s32 %s70, 1
      %s72 = scalar_select %p69, %s70, %s71
      %p75 = pneg %p69
      %p76 = scmp.eq.s32.totalorder %s18, 1
      %p77 = por %p75, %p76
      %p78 = scmp.ne.s32.totalorder %s70, %s73
      %p79 = scmp.eq.s32.totalorder %s18, 0
      %p80 = por %p78, %p79
      %p81 = scmp.ne.s32.totalorder %s70, %s73
      %p82 = scmp.eq.s32.totalorder %s23, 1
      %p83 = por %p81, %p82
      %p84 = scmp.ne.s32.totalorder %s73, %s74
      %p85 = scmp.eq.s32.totalorder %s23, 0
      %p86 = por %p84, %p85
      %p87 = scmp.ne.s32.totalorder %s73, %s74
      %p88 = scmp.eq.s32.totalorder %s24, 1
      %p89 = por %p87, %p88
      %p91 = scmp.ne.s32.totalorder %s74, %s90
      %p92 = scmp.eq.s32.totalorder %s24, 0
      %p93 = por %p91, %p92
      %p94 = scmp.le.s32.totalorder 1, %s18
      %p95 = scmp.lt.s32.totalorder %s18, 3
      %p96 = pnand %p94, %p95
      %p97 = pneg %p96
      // Predicated region
      $region9: #{tpu_custom_call.1} parent=5 // pred_check
        _
      $region10: #{tpu_custom_call.1} parent=5 // pred_check_branch
        %99 = sbr.rel (%p96) target = $region12
      $region11: #{tpu_custom_call.1} parent=5 // pred_region
        %s100 = ssub.s32 %s18, 1
      $region12: #{tpu_custom_call.1} parent=5 // pred_fallthru
        _
      %p101 = scmp.lt.s32.totalorder %s18, 2
      // Predicated region
      $region13: #{tpu_custom_call.1} parent=5 // pred_check
        %p102 = pneg %p101
      $region14: #{tpu_custom_call.1} parent=5 // pred_check_branch
        %104 = sbr.rel (%p102) target = $region16
      $region15: #{tpu_custom_call.1} parent=5 // pred_region
        // Predicated region
        $region17: #{tpu_custom_call.1} parent=15 // pred_check
          %p105 = pneg %p52
        $region18: #{tpu_custom_call.1} parent=15 // pred_check_branch
          %107 = sbr.rel (%p105) target = $region20
        $region19: #{tpu_custom_call.1} parent=15 // pred_region
          %s108 = sand.u32 %s42, 1
          %s109 = scalar_lea.sflag [#allocation5], %s108
          %s110 = sand.u32 %s42, 1
          %s111 = smul.addr %s110, 8
          %s112 = scalar_lea.vmem [#allocation4], %s111
          %s114 = ssub.s32 128, 128
          %115 = vsyncadd %s109, %s114
          %s116 = sadd.s32 %s26, %s25
          %s117 = smul.addr %s116, 128
          %s118 = scalar_lea.hbm %s1, %s117
          %s120 = sshll.u32 %s112, 4
          %s121 = int_to_ptr.vmem [resolvable:$true] %s120
          %123 = dma.hbm_to_vmem [thread:$0]  %s118, 128, %s121, %s109
        $region20: #{tpu_custom_call.1} parent=15 // pred_fallthru
          _
      $region16: #{tpu_custom_call.1} parent=5 // pred_fallthru
        _
      %p124 = scmp.le.s32.totalorder 1, %s18
      %p125 = scmp.lt.s32.totalorder %s18, 3
      %p126 = pnand %p124, %p125
      %p127 = pneg %p126
      // Predicated region
      $region21: #{tpu_custom_call.1} parent=5 // pred_check
        _
      $region22: #{tpu_custom_call.1} parent=5 // pred_check_branch
        %129 = sbr.rel (%p126) target = $region24
      $region23: #{tpu_custom_call.1} parent=5 // pred_region
        %s130 = ssub.s32 %s18, 1
        %s131 = sand.u32 %s45, 1
        %s132 = scalar_lea.sflag [#allocation5], %s131
        %s133 = sand.u32 %s45, 1
        %s134 = smul.addr %s133, 8
        %s135 = scalar_lea.vmem [#allocation4], %s134
        // Predicated region
        $region25: #{tpu_custom_call.1} parent=23 // pred_check
          %p136 = pneg %p58
        $region26: #{tpu_custom_call.1} parent=23 // pred_check_branch
          %138 = sbr.rel (%p136) target = $region28
        $region27: #{tpu_custom_call.1} parent=23 // pred_region
          %139 = dma.done %s132, 128
        $region28: #{tpu_custom_call.1} parent=23 // pred_fallthru
          _
        %s140 = sand.u32 %s45, 1
        %s141 = scalar_lea.sflag [#allocation5], %s140
        %s142 = sand.u32 %s45, 1
        %s143 = smul.addr %s142, 8
        %s144 = scalar_lea.vmem [#allocation4], %s143
        %p145 = pneg %p58
        %p146 = pneg %p55
        %p147 = pneg %p86
        %p148 = pneg %p83
        %s149 = sand.u32 %s73, 1
        %s150 = scalar_lea.sflag [#allocation6], %s149
        %s151 = sand.u32 %s73, 1
        %s152 = smul.addr %s151, 8
        %s153 = scalar_lea.vmem [#allocation7], %s152
        %v154 = vld [vmem:[%s135] sm:$0xff]
        %s155 = sld [smem:[#allocation3 + %s27]]
        %v156 = vstv %s155
        %v157 = vmul.f32 %v154, %v156
        %158 = vst [vmem:[%s153] sm:$0xff] %v157
        %s159 = sand.u32 %s73, 1
        %s160 = scalar_lea.sflag [#allocation6], %s159
        %s161 = sand.u32 %s73, 1
        %s162 = smul.addr %s161, 8
        %s163 = scalar_lea.vmem [#allocation7], %s162
        // Predicated region
        $region29: #{tpu_custom_call.1} parent=23 // pred_check
          %p164 = pneg %p83
        $region30: #{tpu_custom_call.1} parent=23 // pred_check_branch
          %166 = sbr.rel (%p164) target = $region32
        $region31: #{tpu_custom_call.1} parent=23 // pred_region
          %s168 = ssub.s32 128, 128
          %169 = vsyncadd %s160, %s168
          %s170 = sadd.s32 %s28, %s27
          %s171 = smul.addr %s170, 128
          %s172 = scalar_lea.hbm %s2, %s171
          %s174 = sshll.u32 %s163, 4
          %s175 = int_to_ptr.vmem [resolvable:$true] %s174
          %177 = dma.vmem_to_hbm [thread:$0]  %s175, 128, %s172, %s160
        $region32: #{tpu_custom_call.1} parent=23 // pred_fallthru
          _
      $region24: #{tpu_custom_call.1} parent=5 // pred_fallthru
        _
      %p178 = scmp.le.s32.totalorder 2, %s18
      // Predicated region
      $region33: #{tpu_custom_call.1} parent=5 // pred_check
        %p179 = pneg %p178
      $region34: #{tpu_custom_call.1} parent=5 // pred_check_branch
        %181 = sbr.rel (%p179) target = $region36
      $region35: #{tpu_custom_call.1} parent=5 // pred_region
        %s182 = ssub.s32 %s18, 2
        // Predicated region
        $region37: #{tpu_custom_call.1} parent=35 // pred_check
          %p183 = pneg %p89
        $region38: #{tpu_custom_call.1} parent=35 // pred_check_branch
          %185 = sbr.rel (%p183) target = $region40
        $region39: #{tpu_custom_call.1} parent=35 // pred_region
          %s186 = sand.u32 %s74, 1
          %s187 = scalar_lea.sflag [#allocation6], %s186
          %s188 = sand.u32 %s74, 1
          %s189 = smul.addr %s188, 8
          %s190 = scalar_lea.vmem [#allocation7], %s189
          %191 = dma.done %s187, 128
        $region40: #{tpu_custom_call.1} parent=35 // pred_fallthru
          _
      $region36: #{tpu_custom_call.1} parent=5 // pred_fallthru
        _
    $region6: #{tpu_custom_call.1} parent=1 // loop_footer
      %s22 = sadd.s32 1, %s18
    $region7: #{tpu_custom_call.1} parent=1 // loop_footer_branch
      %17 = sbr.rel target = $region3
    $region8: #{tpu_custom_call.1} parent=1 // loop_exit
      _
    %192 = vsyncpa [#allocation5], 1
    %s193 = scalar_lea.sflag [#allocation5], 1
    %194 = vsyncpa %s193, 1
    %195 = vsyncpa [#allocation6], 1
    %s196 = scalar_lea.sflag [#allocation6], 1
    %197 = vsyncpa %s196, 1

</llo_original>
